<compile_context>
chip_gen: v7x
topology: tpu7x:2x2x1
jax: 0.10.0
libtpu: 0.0.40
codegen_flags: <defaults>
</compile_context>

<pallas_src>
import functools

import jax
import jax.numpy as jnp
from jax.experimental import pallas as pl
from jax.experimental.pallas import tpu as pltpu  # noqa: F401  (TPU backend)


# ----------------------------------------------------------------------------
# Config / params (mirrors the PyTorch module's __init__)
# ----------------------------------------------------------------------------
class GuideDiffConfig:
    dimension = 8       # args.dimension  -> time_len
    id_emb = 4          # args.id_emb     -> id_len
    channels = 16       # args.channels
    layers = 2
    use_time = True
    use_id = True
    inputdim = 2
    seq_len = 11
    output_dim = 2

    @property
    def input_dim(self):
        d = self.inputdim
        if self.use_time:
            d += 2 * self.dimension
        if self.use_id:
            d += self.id_emb
        return d


def init_params(cfg, key):
    """Raw PyTorch-layout parameters: weight = (out_features, in_features)."""
    k1, k2, k3, k4, k5, k6, k7 = jax.random.split(key, 7)
    in_dim, ch, out_dim = cfg.input_dim, cfg.channels, cfg.inputdim
    tl_in, tl_out = cfg.seq_len * cfg.output_dim, cfg.output_dim

    def kaiming(k, shape, fan_in):
        return jax.random.normal(k, shape, jnp.float32) * (2.0 / fan_in) ** 0.5

    return {
        # input_projection = Conv1d_with_init(input_dim, channels, 1)
        "in_w": kaiming(k1, (ch, in_dim), in_dim),
        "in_b": jax.random.uniform(k2, (ch,), jnp.float32, -0.1, 0.1),
        # output_projection = Conv1d_with_init(channels, inputdim, 1); weight zeroed
        "out_w": jnp.zeros((out_dim, ch), jnp.float32),
        "out_b": jax.random.uniform(k3, (out_dim,), jnp.float32, -0.1, 0.1),
        # fcEmbedding = nn.Linear(input_dim, channels)
        "fc_w": kaiming(k4, (ch, in_dim), in_dim),
        "fc_b": jax.random.uniform(k5, (ch,), jnp.float32, -0.1, 0.1),
        # time_linear = nn.Linear(seq_len * output_dim, output_dim)
        "tl_w": kaiming(k6, (tl_out, tl_in), tl_in),
        "tl_b": jax.random.uniform(k7, (tl_out,), jnp.float32, -0.1, 0.1),
    }


# ----------------------------------------------------------------------------
# Static layout of the single packed constant slab (all offsets 8-aligned so
# every in-kernel row slice starts on a sublane boundary).
# ----------------------------------------------------------------------------
def _up8(x):
    return -(-x // 8) * 8


def _slab_layout(cfg, B):
    K, ch, D, N, L = cfg.input_dim, cfg.channels, cfg.inputdim, cfg.output_dim, cfg.seq_len
    M = B * L
    W = max(2 * ch, N * D, M, D, N)
    r_wcat = 0                       # (K, 2*ch)   [in_w.T | fc_w.T]
    r_wout = _up8(r_wcat + K)        # (ch, D)     out_w.T
    r_bias = _up8(r_wout + ch)       # 3 rows: b_cat | b_out | b_tl (lane-0 aligned)
    r_g = _up8(r_bias + 3)           # (M, N*D)    per-row time_linear weight map
    r_s = _up8(r_g + M)              # (M, M)      0/1 batch-selection (rows >= B zero)
    r_rsum = _up8(r_s + M)           # (N*D, N)    0/1 D-group-sum matrix
    rows = _up8(r_rsum + N * D)
    return dict(K=K, ch=ch, D=D, N=N, L=L, M=M, B=B, W=W, rows=rows,
                r_wcat=r_wcat, r_wout=r_wout, r_bias=r_bias,
                r_g=r_g, r_s=r_s, r_rsum=r_rsum)


def prepare_params(cfg, p, B):
    """One-time pack of ALL constants into a single kernel-friendly slab."""
    lay = _slab_layout(cfg, B)
    ch, D, N, L, M, W = lay["ch"], lay["D"], lay["N"], lay["L"], lay["M"], lay["W"]
    # time_linear's in_features is seq_len*output_dim; mapping y rows (width
    # inputdim) onto it assumes inputdim == output_dim (same as the PyTorch
    # module's implicit assumption).
    assert D == N, "time_linear mapping assumes inputdim == output_dim"

    w_cat = jnp.concatenate([p["in_w"].T, p["fc_w"].T], axis=1)           # (K, 2*ch)
    w_out_t = p["out_w"].T                                                # (ch, D)

    # g_base[l, n*D + d] = tl_w[n, l*D + d]; tiled over batches once, at prep.
    tl_w_t = p["tl_w"].T                                                  # (L*D, N)
    g_base = jnp.transpose(tl_w_t.reshape(L, D, N), (0, 2, 1)).reshape(L, N * D)
    g_mat = jnp.tile(g_base, (B, 1))                                      # (M, N*D)

    # S_pad[i, m] = 1 iff i == m // L  (rows >= B are all zero).
    s_pad = (jnp.arange(M)[:, None] ==
             (jnp.arange(M)[None, :] // L)).astype(jnp.float32)           # (M, M)

    # Rsum[n*D + d, n'] = 1 iff n == n'  (sums d within each n group).
    r_sum = jnp.repeat(jnp.eye(N, dtype=jnp.float32), D, axis=0)          # (N*D, N)

    slab = jnp.zeros((lay["rows"], W), jnp.float32)

    def put(s, r0, a):
        return s.at[r0:r0 + a.shape[0], :a.shape[1]].set(a)

    slab = put(slab, lay["r_wcat"], w_cat)
    slab = put(slab, lay["r_wout"], w_out_t)
    slab = put(slab, lay["r_bias"] + 0,
               jnp.concatenate([p["in_b"], p["fc_b"]]).reshape(1, -1))    # b_cat
    slab = put(slab, lay["r_bias"] + 1, p["out_b"].reshape(1, -1))        # b_out
    slab = put(slab, lay["r_bias"] + 2, p["tl_b"].reshape(1, -1))         # b_tl
    slab = put(slab, lay["r_g"], g_mat)
    slab = put(slab, lay["r_s"], s_pad)
    slab = put(slab, lay["r_rsum"], r_sum)
    return slab, lay


# ----------------------------------------------------------------------------
# Fused kernel: all four layers in one pass; 2 input DMAs, 1 output DMA.
#   x_ref : (M, K)        activations, M = B*L rows, K = input_dim
#   c_ref : (rows, W)     packed constant slab (see _slab_layout)
#   o_ref : (M, 2*ch+D+N) lane-packed output [h|emb | y | t]
# ----------------------------------------------------------------------------
def _fused_guide_diff_kernel(lay, x_ref, c_ref, o_ref):
    K, ch, D, N, M = lay["K"], lay["ch"], lay["D"], lay["N"], lay["M"]
    r_wcat, r_wout, r_bias = lay["r_wcat"], lay["r_wout"], lay["r_bias"]
    r_g, r_s, r_rsum = lay["r_g"], lay["r_s"], lay["r_rsum"]

    x = x_ref[...]                                                   # (M, K)

    # input_projection + fcEmbedding: one MXU matmul over the shared rows.
    w_cat = c_ref[r_wcat:r_wcat + K, :2 * ch]                        # (K, 2*ch)
    b_cat = c_ref[r_bias:r_bias + 1, :2 * ch]                        # lane-0 row
    he = jnp.dot(x, w_cat, preferred_element_type=jnp.float32) + b_cat

    # output_projection on the h half (stays in vregs, no HBM round-trip).
    w_out = c_ref[r_wout:r_wout + ch, :D]                            # (ch, D)
    b_out = c_ref[r_bias + 1:r_bias + 2, :D]                         # lane-0 row
    y = jnp.dot(he[:, :ch], w_out, preferred_element_type=jnp.float32) + b_out

    # time_linear without reshape and without XLU lane-reductions:
    #   z[m, n*D+d] = y[m, d] * tl_w[n, (m%L)*D + d]
    #   r = z @ Rsum      (sums d within each n group, on the MXU)
    #   t = S_pad @ r     (sums the L positions of each batch; rows >= B = 0)
    g = c_ref[r_g:r_g + M, :N * D]                                   # (M, N*D)
    z = jnp.concatenate([y] * N, axis=1) * g                         # (M, N*D)
    r_sum = c_ref[r_rsum:r_rsum + N * D, :N]                         # (N*D, N)
    r = jnp.dot(z, r_sum, preferred_element_type=jnp.float32)        # (M, N)
    s_pad = c_ref[r_s:r_s + M, :M]                                   # (M, M)
    b_tl = c_ref[r_bias + 2:r_bias + 3, :N]                          # lane-0 row
    t = jnp.dot(s_pad, r, preferred_element_type=jnp.float32) + b_tl  # (M, N)

    # Single lane-packed output slab -> one store stream, one output DMA.
    o_ref[...] = jnp.concatenate([he, y, t], axis=1)


# ----------------------------------------------------------------------------
# Forward builder: static layout captured in a closure, one jitted callable.
# ----------------------------------------------------------------------------
def make_guide_diff_forward(lay):
    K, ch, D, N = lay["K"], lay["ch"], lay["D"], lay["N"]
    M, B, L = lay["M"], lay["B"], lay["L"]
    rows, W = lay["rows"], lay["W"]
    out_w = 2 * ch + D + N

    call = pl.pallas_call(
        functools.partial(_fused_guide_diff_kernel, lay),
        out_shape=jax.ShapeDtypeStruct((M, out_w), jnp.float32),
        # Full-array blocks: everything fits one VMEM tile at these shapes.
        in_specs=[
            pl.BlockSpec((M, K), lambda: (0, 0)),
            pl.BlockSpec((rows, W), lambda: (0, 0)),
        ],
        out_specs=pl.BlockSpec((M, out_w), lambda: (0, 0)),
    )

    @jax.jit
    def forward(const_slab, x_ncl):
        """
        x_ncl: (B, input_dim, seq_len) float32, PyTorch NCL conv layout.
        Returns (h, emb, y, t):
          h   = input_projection(x)                  (B, channels, seq_len)
          emb = fcEmbedding(x as (B, L, input_dim))  (B, seq_len, channels)
          y   = output_projection(h)                 (B, inputdim, seq_len)
          t   = time_linear(y flattened per batch)   (B, output_dim)
        """
        x_flat = jnp.transpose(x_ncl, (0, 2, 1)).reshape(M, K)       # (M, K)
        slab = call(x_flat, const_slab)                              # (M, 36)
        he = slab[:, :2 * ch]
        h = jnp.transpose(he[:, :ch].reshape(B, L, ch), (0, 2, 1))   # (B, ch, L)
        emb = he[:, ch:].reshape(B, L, ch)                           # (B, L, ch)
        y = jnp.transpose(slab[:, 2 * ch:2 * ch + D].reshape(B, L, D),
                          (0, 2, 1))                                 # (B, D, L)
        t = slab[:B, 2 * ch + D:]                                    # (B, N)
        return h, emb, y, t

    return forward


if __name__ == "__main__":
    cfg = GuideDiffConfig()
    key = jax.random.PRNGKey(0)
    kx, kp = jax.random.split(key)

    B = 2
    x = jax.random.normal(kx, (B, cfg.input_dim, cfg.seq_len), jnp.float32)
    params = init_params(cfg, kp)
    const_slab, lay = prepare_params(cfg, params, B)
    forward = make_guide_diff_forward(lay)

    h, emb, y, t = forward(const_slab, x)
    jax.block_until_ready((h, emb, y, t))

    # ---- sanity checks against a pure-JAX reference ------------------------
    prec = jax.lax.Precision.HIGHEST
    x_nlc = jnp.transpose(x, (0, 2, 1))
    h_ref = jnp.einsum("blc,oc->bol", x_nlc, params["in_w"],
                       precision=prec) + params["in_b"][None, :, None]
    emb_ref = jnp.einsum("blc,hc->blh", x_nlc, params["fc_w"],
                         precision=prec) + params["fc_b"]
    y_ref = jnp.einsum("bcl,oc->bol", h_ref, params["out_w"],
                       precision=prec) + params["out_b"][None, :, None]
    y_flat_ref = jnp.transpose(y_ref, (0, 2, 1)).reshape(B, -1)
    t_ref = jnp.einsum("bk,nk->bn", y_flat_ref, params["tl_w"],
                       precision=prec) + params["tl_b"]

    assert h.shape == (B, cfg.channels, cfg.seq_len)
    assert emb.shape == (B, cfg.seq_len, cfg.channels)
    assert y.shape == (B, cfg.inputdim, cfg.seq_len)
    assert t.shape == (B, cfg.output_dim)
    assert jnp.allclose(h, h_ref, atol=1e-3), "input_projection mismatch"
    assert jnp.allclose(emb, emb_ref, atol=1e-3), "fcEmbedding mismatch"
    assert jnp.allclose(y, y_ref, atol=1e-3), "output_projection mismatch"
    # output_projection weight is zero -> every channel equals its bias
    assert jnp.allclose(y, params["out_b"][None, :, None] * jnp.ones_like(y),
                        atol=1e-5)
    assert jnp.allclose(t, t_ref, atol=1e-3), "time_linear mismatch"

    print("KERNEL_OK")
</pallas_src>

<mosaic_0001>
module attributes {stable_mosaic.version = 11 : i64} {
  func.func @_fused_guide_diff_kernel(%arg0: memref<22x22xf32, #tpu.memory_space<vmem>>, %arg1: memref<104x32xf32, #tpu.memory_space<vmem>>, %arg2: memref<22x36xf32, #tpu.memory_space<vmem>>) attributes {dimension_semantics = [], scalar_prefetch = 0 : i64, scratch_operands = 0 : i64, tpu.core_type = #tpu.core_type<tc>} {
    %c0 = arith.constant 0 : index
    %c0_0 = arith.constant 0 : index
    %0 = vector.load %arg0[%c0, %c0_0] : memref<22x22xf32, #tpu.memory_space<vmem>>, vector<22x22xf32>
    %c0_1 = arith.constant 0 : index
    %c0_2 = arith.constant 0 : index
    %1 = vector.load %arg1[%c0_1, %c0_2] : memref<104x32xf32, #tpu.memory_space<vmem>>, vector<22x32xf32>
    %c40 = arith.constant 40 : index
    %c0_3 = arith.constant 0 : index
    %2 = vector.load %arg1[%c40, %c0_3] : memref<104x32xf32, #tpu.memory_space<vmem>>, vector<1x32xf32>
    %cst = arith.constant dense<0.000000e+00> : vector<22x32xf32>
    %3 = tpu.matmul %0, %1, %cst {dimension_numbers = #tpu.dot_dimension_numbers<[1], [0], [0], [1], [0, 0, 1, 1], [], []>} : vector<22x22xf32>, vector<22x32xf32>, vector<22x32xf32> -> vector<22x32xf32>
    %4 = vector.broadcast %2 : vector<1x32xf32> to vector<22x32xf32>
    %5 = arith.addf %3, %4 : vector<22x32xf32>
    %c24 = arith.constant 24 : index
    %c0_4 = arith.constant 0 : index
    %6 = vector.load %arg1[%c24, %c0_4] : memref<104x32xf32, #tpu.memory_space<vmem>>, vector<16x2xf32>
    %c41 = arith.constant 41 : index
    %c0_5 = arith.constant 0 : index
    %7 = vector.load %arg1[%c41, %c0_5] : memref<104x32xf32, #tpu.memory_space<vmem>>, vector<1x2xf32>
    %8 = vector.extract_strided_slice %5 {offsets = [0, 0], sizes = [22, 16], strides = [1, 1]} : vector<22x32xf32> to vector<22x16xf32>
    %cst_6 = arith.constant dense<0.000000e+00> : vector<22x2xf32>
    %9 = tpu.matmul %8, %6, %cst_6 {dimension_numbers = #tpu.dot_dimension_numbers<[1], [0], [0], [1], [0, 0, 1, 1], [], []>} : vector<22x16xf32>, vector<16x2xf32>, vector<22x2xf32> -> vector<22x2xf32>
    %10 = vector.broadcast %7 : vector<1x2xf32> to vector<22x2xf32>
    %11 = arith.addf %9, %10 : vector<22x2xf32>
    %c48 = arith.constant 48 : index
    %c0_7 = arith.constant 0 : index
    %12 = vector.load %arg1[%c48, %c0_7] : memref<104x32xf32, #tpu.memory_space<vmem>>, vector<22x4xf32>
    %13 = tpu.concatenate %11, %11 in 1 : vector<22x2xf32>, vector<22x2xf32> -> vector<22x4xf32>
    %14 = arith.mulf %13, %12 : vector<22x4xf32>
    %c96 = arith.constant 96 : index
    %c0_8 = arith.constant 0 : index
    %15 = vector.load %arg1[%c96, %c0_8] : memref<104x32xf32, #tpu.memory_space<vmem>>, vector<4x2xf32>
    %cst_9 = arith.constant dense<0.000000e+00> : vector<22x2xf32>
    %16 = tpu.matmul %14, %15, %cst_9 {dimension_numbers = #tpu.dot_dimension_numbers<[1], [0], [0], [1], [0, 0, 1, 1], [], []>} : vector<22x4xf32>, vector<4x2xf32>, vector<22x2xf32> -> vector<22x2xf32>
    %c72 = arith.constant 72 : index
    %c0_10 = arith.constant 0 : index
    %17 = vector.load %arg1[%c72, %c0_10] : memref<104x32xf32, #tpu.memory_space<vmem>>, vector<22x22xf32>
    %c42 = arith.constant 42 : index
    %c0_11 = arith.constant 0 : index
    %18 = vector.load %arg1[%c42, %c0_11] : memref<104x32xf32, #tpu.memory_space<vmem>>, vector<1x2xf32>
    %cst_12 = arith.constant dense<0.000000e+00> : vector<22x2xf32>
    %19 = tpu.matmul %17, %16, %cst_12 {dimension_numbers = #tpu.dot_dimension_numbers<[1], [0], [0], [1], [0, 0, 1, 1], [], []>} : vector<22x22xf32>, vector<22x2xf32>, vector<22x2xf32> -> vector<22x2xf32>
    %20 = vector.broadcast %18 : vector<1x2xf32> to vector<22x2xf32>
    %21 = arith.addf %19, %20 : vector<22x2xf32>
    %22 = tpu.concatenate %5, %11, %21 in 1 : vector<22x32xf32>, vector<22x2xf32>, vector<22x2xf32> -> vector<22x36xf32>
    %c0_13 = arith.constant 0 : index
    %c0_14 = arith.constant 0 : index
    %23 = vector.load %arg2[%c0_13, %c0_14] : memref<22x36xf32, #tpu.memory_space<vmem>>, vector<22x36xf32>
    tpu.vector_store %arg2[%c0_13, %c0_14], %22 {strides = array<i32>} : memref<22x36xf32, #tpu.memory_space<vmem>>, vector<22x36xf32>,
    return
  }
}

</mosaic_0001>

<llo_original>
// kernel: forward.1
$region0: #{forward.1}
  #allocation0 [shape = 'u32[]', space=smem, size = 0x4, offset = 0x4, fixed_abs, tag = 'smem constant byte address 0x4 - core index']
  #allocation1 [shape = 'u32[144,128]{1,0:T(1,128)}', space=vmem, size = 0x12000, scoped, tag = 'internal scratch']
  %s0 = inlined_call_operand.vmem [shape: f32[22,22], index: 0, kind: input, shape index: {}]
  %s1 = inlined_call_operand.vmem [shape: f32[104,32], index: 1, kind: input, shape index: {}]
  %s2 = inlined_call_operand.vmem [shape: f32[22,36], index: 2, kind: output, shape index: {}]
  %s3 = sld [smem:[#allocation0]]
  $region18: #{forward.1} parent=0
    _
  %s5 = ssub.s32 1, %s3
  %s6 = scalar_select 0, %s5, %s3
  // Predicated region
  $region2: #{forward.1} parent=0 // pred_check
    _
  $region3: #{forward.1} parent=0 // pred_check_branch
    %8 = sbr.rel (0) target = $region5
  $region4: #{forward.1} parent=0 // pred_region
    _
  $region5: #{forward.1} parent=0 // pred_fallthru
    _
  // Predicated region
  $region6: #{forward.1} parent=0 // pred_check
    _
  $region7: #{forward.1} parent=0 // pred_check_branch
    %10 = sbr.rel (0) target = $region9
  $region8: #{forward.1} parent=0 // pred_region
    _
  $region9: #{forward.1} parent=0 // pred_fallthru
    _
  %v11 = vld [vmem:[%s0] sm:$0xff]
  %v12 = vld [vmem:[%s0 + $0x8] sm:$0xff]
  %v13 = vld [vmem:[%s0 + $0x10] sm:$0x3f]
  %v14 = vld [vmem:[%s1] sm:$0xff]
  %v15 = vld [vmem:[%s1 + $0x8] sm:$0xff]
  %v16 = vld [vmem:[%s1 + $0x10] sm:$0x3f]
  %v17 = vld [vmem:[%s1 + $0x28] sm:$0x1]
  %v18 = vlaneseq
  %v19 = vshrl.u32 %v18, 7
  %v20 = vsub.s32 0, %v19
  %v21 = vrot.slane %v17, %v20
  %vm22 = vcmask 179200
  %v24 = vsel %vm22, %v11, 0
  %v27 = vsel %vm22, %v12, 0
  %v30 = vsel %vm22, %v13, 0
  %vm32 = vcmask 1045504
  %v34 = vsel %vm32, %v16, 0
  %36 = vmatprep.subr.mxu0 0.0
  %37 = vmatpush1.msra.mxu0 %v14
  %38 = vmatprep.subr.mxu0 0.0
  %39 = vmatpush1.msra.mxu0 %v15
  %40 = vmatprep.subr.mxu0 0.0
  %41 = vmatpush1.msra.mxu0 %v34
  %42 = vmatprep.subr.mxu0 0.0
  %43 = vmatpush1.msra.mxu0 0.0
  %44 = vmatprep.subr.mxu0 0.0
  %45 = vmatpush1.msra.mxu0 0.0
  %46 = vmatprep.subr.mxu0 0.0
  %47 = vmatpush1.msra.mxu0 0.0
  %48 = vmatprep.subr.mxu0 0.0
  %49 = vmatpush1.msra.mxu0 0.0
  %50 = vmatprep.subr.mxu0 0.0
  %51 = vmatpush1.msra.mxu0 0.0
  %52 = vmatprep.subr.mxu0 0.0
  %53 = vmatpush1.msra.mxu0 0.0
  %54 = vmatprep.subr.mxu0 0.0
  %55 = vmatpush1.msra.mxu0 0.0
  %56 = vmatprep.subr.mxu0 0.0
  %57 = vmatpush1.msra.mxu0 0.0
  %58 = vmatprep.subr.mxu0 0.0
  %59 = vmatpush1.msra.mxu0 0.0
  %60 = vmatprep.subr.mxu0 0.0
  %61 = vmatpush1.msra.mxu0 0.0
  %62 = vmatprep.subr.mxu0 0.0
  %63 = vmatpush1.msra.mxu0 0.0
  %64 = vmatprep.subr.mxu0 0.0
  %65 = vmatpush1.msra.mxu0 0.0
  %66 = vmatprep.subr.mxu0 0.0
  %67 = vmatpush1.msra.mxu0 0.0
  %68 = vmatprep.subr.mxu0 0.0
  %69 = vmatpush1.msra.mxu0 0.0
  %70 = vmatprep.subr.mxu0 0.0
  %71 = vmatpush1.msra.mxu0 0.0
  %72 = vmatprep.subr.mxu0 0.0
  %73 = vmatpush1.msra.mxu0 0.0
  %74 = vmatprep.subr.mxu0 0.0
  %75 = vmatpush1.msra.mxu0 0.0
  %76 = vmatprep.subr.mxu0 0.0
  %77 = vmatpush1.msra.mxu0 0.0
  %78 = vmatprep.subr.mxu0 0.0
  %79 = vmatpush1.msra.mxu0 0.0
  %80 = vmatprep.subr.mxu0 0.0
  %81 = vmatpush1.msra.mxu0 0.0
  %82 = vmatprep.subr.mxu0 0.0
  %83 = vmatpush1.msra.mxu0 0.0
  %84 = vmatprep.subr.mxu0 0.0
  %85 = vmatpush1.msra.mxu0 0.0
  %86 = vmatprep.subr.mxu0 0.0
  %87 = vmatpush1.msra.mxu0 0.0
  %88 = vmatprep.subr.mxu0 0.0
  %89 = vmatpush1.msra.mxu0 0.0
  %90 = vmatprep.subr.mxu0 0.0
  %91 = vmatpush1.msra.mxu0 0.0
  %92 = vmatprep.subr.mxu0 0.0
  %93 = vmatpush1.msra.mxu0 0.0
  %94 = vmatprep.subr.mxu0 0.0
  %95 = vmatpush1.msra.mxu0 0.0
  %96 = vmatprep.subr.mxu0 0.0
  %97 = vmatpush1.msra.mxu0 0.0
  %98 = vmatprep.subr.mxu0 0.0
  %99 = vmatpush1.msra.mxu0 0.0
  %100 = vmatprep.mubr.f32.mxu0 0.0
  %101 = vmatmul.mubr.f32.gmra.mrb[0].mxu0 %v24
  %v102 = vpop.f32.mrb[0].mxu0
  %v103 = vadd.f32 %v21, %v102
  %v104 = vpop.f32.mrb[0].mxu0
  %105 = vmatprep.mubr.f32.mxu0 0.0
  %106 = vmatmul.mubr.f32.gmra.mrb[0].mxu0 %v27
  %v107 = vpop.f32.mrb[0].mxu0
  %v108 = vadd.f32 %v21, %v107
  %v109 = vpop.f32.mrb[0].mxu0
  %110 = vmatprep.mubr.f32.mxu0 0.0
  %111 = vmatmul.mubr.f32.gmra.mrb[0].mxu0 %v30
  %v112 = vpop.f32.mrb[0].mxu0
  %v113 = vadd.f32 %v21, %v112
  %v114 = vpop.f32.mrb[0].mxu0
  %115 = vdwg.mxu0
  %v116 = vld [vmem:[%s1 + $0x18] sm:$0xff]
  %v117 = vld [vmem:[%s1 + $0x20] sm:$0xff]
  %v118 = vld [vmem:[%s1 + $0x29] sm:$0x1]
  %v119 = vlaneseq
  %v120 = vshrl.u32 %v119, 7
  %v121 = vsub.s32 0, %v120
  %v122 = vrot.slane %v118, %v121
  %vm123 = vcmask 130048
  %v125 = vsel %vm123, %v103, 0
  %v128 = vsel %vm123, %v108, 0
  %v131 = vsel %vm123, %v113, 0
  %133 = vmatprep.subr.mxu0 0.0
  %134 = vmatpush1.msra.mxu0 %v116
  %135 = vmatprep.subr.mxu0 0.0
  %136 = vmatpush1.msra.mxu0 %v117
  %137 = vmatprep.subr.mxu0 0.0
  %138 = vmatpush1.msra.mxu0 0.0
  %139 = vmatprep.subr.mxu0 0.0
  %140 = vmatpush1.msra.mxu0 0.0
  %141 = vmatprep.subr.mxu0 0.0
  %142 = vmatpush1.msra.mxu0 0.0
  %143 = vmatprep.subr.mxu0 0.0
  %144 = vmatpush1.msra.mxu0 0.0
  %145 = vmatprep.subr.mxu0 0.0
  %146 = vmatpush1.msra.mxu0 0.0
  %147 = vmatprep.subr.mxu0 0.0
  %148 = vmatpush1.msra.mxu0 0.0
  %149 = vmatprep.subr.mxu0 0.0
  %150 = vmatpush1.msra.mxu0 0.0
  %151 = vmatprep.subr.mxu0 0.0
  %152 = vmatpush1.msra.mxu0 0.0
  %153 = vmatprep.subr.mxu0 0.0
  %154 = vmatpush1.msra.mxu0 0.0
  %155 = vmatprep.subr.mxu0 0.0
  %156 = vmatpush1.msra.mxu0 0.0
  %157 = vmatprep.subr.mxu0 0.0
  %158 = vmatpush1.msra.mxu0 0.0
  %159 = vmatprep.subr.mxu0 0.0
  %160 = vmatpush1.msra.mxu0 0.0
  %161 = vmatprep.subr.mxu0 0.0
  %162 = vmatpush1.msra.mxu0 0.0
  %163 = vmatprep.subr.mxu0 0.0
  %164 = vmatpush1.msra.mxu0 0.0
  %165 = vmatprep.subr.mxu0 0.0
  %166 = vmatpush1.msra.mxu0 0.0
  %167 = vmatprep.subr.mxu0 0.0
  %168 = vmatpush1.msra.mxu0 0.0
  %169 = vmatprep.subr.mxu0 0.0
  %170 = vmatpush1.msra.mxu0 0.0
  %171 = vmatprep.subr.mxu0 0.0
  %172 = vmatpush1.msra.mxu0 0.0
  %173 = vmatprep.subr.mxu0 0.0
  %174 = vmatpush1.msra.mxu0 0.0
  %175 = vmatprep.subr.mxu0 0.0
  %176 = vmatpush1.msra.mxu0 0.0
  %177 = vmatprep.subr.mxu0 0.0
  %178 = vmatpush1.msra.mxu0 0.0
  %179 = vmatprep.subr.mxu0 0.0
  %180 = vmatpush1.msra.mxu0 0.0
  %181 = vmatprep.subr.mxu0 0.0
  %182 = vmatpush1.msra.mxu0 0.0
  %183 = vmatprep.subr.mxu0 0.0
  %184 = vmatpush1.msra.mxu0 0.0
  %185 = vmatprep.subr.mxu0 0.0
  %186 = vmatpush1.msra.mxu0 0.0
  %187 = vmatprep.subr.mxu0 0.0
  %188 = vmatpush1.msra.mxu0 0.0
  %189 = vmatprep.subr.mxu0 0.0
  %190 = vmatpush1.msra.mxu0 0.0
  %191 = vmatprep.subr.mxu0 0.0
  %192 = vmatpush1.msra.mxu0 0.0
  %193 = vmatprep.subr.mxu0 0.0
  %194 = vmatpush1.msra.mxu0 0.0
  %195 = vmatprep.subr.mxu0 0.0
  %196 = vmatpush1.msra.mxu0 0.0
  %197 = vmatprep.mubr.f32.mxu0 0.0
  %198 = vmatmul.mubr.f32.gmra.mrb[0].mxu0 %v125
  %v199 = vpop.f32.mrb[0].mxu0
  %v200 = vadd.f32 %v122, %v199
  %v201 = vpop.f32.mrb[0].mxu0
  %202 = vmatprep.mubr.f32.mxu0 0.0
  %203 = vmatmul.mubr.f32.gmra.mrb[0].mxu0 %v128
  %v204 = vpop.f32.mrb[0].mxu0
  %v205 = vadd.f32 %v122, %v204
  %v206 = vpop.f32.mrb[0].mxu0
  %207 = vmatprep.mubr.f32.mxu0 0.0
  %208 = vmatmul.mubr.f32.gmra.mrb[0].mxu0 %v131
  %v209 = vpop.f32.mrb[0].mxu0
  %v210 = vadd.f32 %v122, %v209
  %v211 = vpop.f32.mrb[0].mxu0
  %212 = vdwg.mxu0
  %v213 = vld [vmem:[%s1 + $0x30] sm:$0xff]
  %v214 = vld [vmem:[%s1 + $0x38] sm:$0xff]
  %v215 = vld [vmem:[%s1 + $0x40] sm:$0x3f]
  %219 = vrot.lane.b32.xlu0 %v200, 2
  %v220 = vpop.permute.xlu0 %219
  %221 = vrot.lane.b32.xlu0 %v205, 2
  %v222 = vpop.permute.xlu0 %221
  %223 = vrot.lane.b32.xlu0 %v210, 2
  %v224 = vpop.permute.xlu0 %223
  %vm228 = vcmask 15360
  %v229 = vsel %vm228, %v200, %v220
  %v230 = vsel %vm228, %v205, %v222
  %v231 = vsel %vm228, %v210, %v224
  %v232 = vmul.f32 %v229, %v213
  %v233 = vmul.f32 %v230, %v214
  %v234 = vmul.f32 %v231, %v215
  %v235 = vld [vmem:[%s1 + $0x60] sm:$0xf]
  %vm236 = vcmask 31744
  %v238 = vsel %vm236, %v232, 0
  %v241 = vsel %vm236, %v233, 0
  %v244 = vsel %vm236, %v234, 0
  %vm246 = vcmask 1043456
  %v248 = vsel %vm246, %v235, 0
  %250 = vmatprep.subr.mxu0 0.0
  %251 = vmatpush1.msra.mxu0 %v248
  %252 = vmatprep.subr.mxu0 0.0
  %253 = vmatpush1.msra.mxu0 0.0
  %254 = vmatprep.subr.mxu0 0.0
  %255 = vmatpush1.msra.mxu0 0.0
  %256 = vmatprep.subr.mxu0 0.0
  %257 = vmatpush1.msra.mxu0 0.0
  %258 = vmatprep.subr.mxu0 0.0
  %259 = vmatpush1.msra.mxu0 0.0
  %260 = vmatprep.subr.mxu0 0.0
  %261 = vmatpush1.msra.mxu0 0.0
  %262 = vmatprep.subr.mxu0 0.0
  %263 = vmatpush1.msra.mxu0 0.0
  %264 = vmatprep.subr.mxu0 0.0
  %265 = vmatpush1.msra.mxu0 0.0
  %266 = vmatprep.subr.mxu0 0.0
  %267 = vmatpush1.msra.mxu0 0.0
  %268 = vmatprep.subr.mxu0 0.0
  %269 = vmatpush1.msra.mxu0 0.0
  %270 = vmatprep.subr.mxu0 0.0
  %271 = vmatpush1.msra.mxu0 0.0
  %272 = vmatprep.subr.mxu0 0.0
  %273 = vmatpush1.msra.mxu0 0.0
  %274 = vmatprep.subr.mxu0 0.0
  %275 = vmatpush1.msra.mxu0 0.0
  %276 = vmatprep.subr.mxu0 0.0
  %277 = vmatpush1.msra.mxu0 0.0
  %278 = vmatprep.subr.mxu0 0.0
  %279 = vmatpush1.msra.mxu0 0.0
  %280 = vmatprep.subr.mxu0 0.0
  %281 = vmatpush1.msra.mxu0 0.0
  %282 = vmatprep.subr.mxu0 0.0
  %283 = vmatpush1.msra.mxu0 0.0
  %284 = vmatprep.subr.mxu0 0.0
  %285 = vmatpush1.msra.mxu0 0.0
  %286 = vmatprep.subr.mxu0 0.0
  %287 = vmatpush1.msra.mxu0 0.0
  %288 = vmatprep.subr.mxu0 0.0
  %289 = vmatpush1.msra.mxu0 0.0
  %290 = vmatprep.subr.mxu0 0.0
  %291 = vmatpush1.msra.mxu0 0.0
  %292 = vmatprep.subr.mxu0 0.0
  %293 = vmatpush1.msra.mxu0 0.0
  %294 = vmatprep.subr.mxu0 0.0
  %295 = vmatpush1.msra.mxu0 0.0
  %296 = vmatprep.subr.mxu0 0.0
  %297 = vmatpush1.msra.mxu0 0.0
  %298 = vmatprep.subr.mxu0 0.0
  %299 = vmatpush1.msra.mxu0 0.0
  %300 = vmatprep.subr.mxu0 0.0
  %301 = vmatpush1.msra.mxu0 0.0
  %302 = vmatprep.subr.mxu0 0.0
  %303 = vmatpush1.msra.mxu0 0.0
  %304 = vmatprep.subr.mxu0 0.0
  %305 = vmatpush1.msra.mxu0 0.0
  %306 = vmatprep.subr.mxu0 0.0
  %307 = vmatpush1.msra.mxu0 0.0
  %308 = vmatprep.subr.mxu0 0.0
  %309 = vmatpush1.msra.mxu0 0.0
  %310 = vmatprep.subr.mxu0 0.0
  %311 = vmatpush1.msra.mxu0 0.0
  %312 = vmatprep.subr.mxu0 0.0
  %313 = vmatpush1.msra.mxu0 0.0
  %314 = vmatprep.mubr.f32.mxu0 0.0
  %315 = vmatmul.mubr.f32.gmra.mrb[0].mxu0 %v238
  %v316 = vpop.f32.mrb[0].mxu0
  %v317 = vadd.f32 0.0, %v316
  %v318 = vpop.f32.mrb[0].mxu0
  %319 = vmatprep.mubr.f32.mxu0 0.0
  %320 = vmatmul.mubr.f32.gmra.mrb[0].mxu0 %v241
  %v321 = vpop.f32.mrb[0].mxu0
  %v322 = vadd.f32 0.0, %v321
  %v323 = vpop.f32.mrb[0].mxu0
  %324 = vmatprep.mubr.f32.mxu0 0.0
  %325 = vmatmul.mubr.f32.gmra.mrb[0].mxu0 %v244
  %v326 = vpop.f32.mrb[0].mxu0
  %v327 = vadd.f32 0.0, %v326
  %v328 = vpop.f32.mrb[0].mxu0
  %329 = vdwg.mxu0
  %v330 = vld [vmem:[%s1 + $0x48] sm:$0xff]
  %v331 = vld [vmem:[%s1 + $0x50] sm:$0xff]
  %v332 = vld [vmem:[%s1 + $0x58] sm:$0x3f]
  %v333 = vld [vmem:[%s1 + $0x2a] sm:$0x1]
  %v334 = vlaneseq
  %v335 = vshrl.u32 %v334, 7
  %v336 = vsub.s32 0, %v335
  %v337 = vrot.slane %v333, %v336
  %v339 = vsel %vm22, %v330, 0
  %v342 = vsel %vm22, %v331, 0
  %v345 = vsel %vm22, %v332, 0
  %v348 = vsel %vm32, %v327, 0
  %350 = vmatprep.subr.mxu0 0.0
  %351 = vmatpush1.msra.mxu0 %v317
  %352 = vmatprep.subr.mxu0 0.0
  %353 = vmatpush1.msra.mxu0 %v322
  %354 = vmatprep.subr.mxu0 0.0
  %355 = vmatpush1.msra.mxu0 %v348
  %356 = vmatprep.subr.mxu0 0.0
  %357 = vmatpush1.msra.mxu0 0.0
  %358 = vmatprep.subr.mxu0 0.0
  %359 = vmatpush1.msra.mxu0 0.0
  %360 = vmatprep.subr.mxu0 0.0
  %361 = vmatpush1.msra.mxu0 0.0
  %362 = vmatprep.subr.mxu0 0.0
  %363 = vmatpush1.msra.mxu0 0.0
  %364 = vmatprep.subr.mxu0 0.0
  %365 = vmatpush1.msra.mxu0 0.0
  %366 = vmatprep.subr.mxu0 0.0
  %367 = vmatpush1.msra.mxu0 0.0
  %368 = vmatprep.subr.mxu0 0.0
  %369 = vmatpush1.msra.mxu0 0.0
  %370 = vmatprep.subr.mxu0 0.0
  %371 = vmatpush1.msra.mxu0 0.0
  %372 = vmatprep.subr.mxu0 0.0
  %373 = vmatpush1.msra.mxu0 0.0
  %374 = vmatprep.subr.mxu0 0.0
  %375 = vmatpush1.msra.mxu0 0.0
  %376 = vmatprep.subr.mxu0 0.0
  %377 = vmatpush1.msra.mxu0 0.0
  %378 = vmatprep.subr.mxu0 0.0
  %379 = vmatpush1.msra.mxu0 0.0
  %380 = vmatprep.subr.mxu0 0.0
  %381 = vmatpush1.msra.mxu0 0.0
  %382 = vmatprep.subr.mxu0 0.0
  %383 = vmatpush1.msra.mxu0 0.0
  %384 = vmatprep.subr.mxu0 0.0
  %385 = vmatpush1.msra.mxu0 0.0
  %386 = vmatprep.subr.mxu0 0.0
  %387 = vmatpush1.msra.mxu0 0.0
  %388 = vmatprep.subr.mxu0 0.0
  %389 = vmatpush1.msra.mxu0 0.0
  %390 = vmatprep.subr.mxu0 0.0
  %391 = vmatpush1.msra.mxu0 0.0
  %392 = vmatprep.subr.mxu0 0.0
  %393 = vmatpush1.msra.mxu0 0.0
  %394 = vmatprep.subr.mxu0 0.0
  %395 = vmatpush1.msra.mxu0 0.0
  %396 = vmatprep.subr.mxu0 0.0
  %397 = vmatpush1.msra.mxu0 0.0
  %398 = vmatprep.subr.mxu0 0.0
  %399 = vmatpush1.msra.mxu0 0.0
  %400 = vmatprep.subr.mxu0 0.0
  %401 = vmatpush1.msra.mxu0 0.0
  %402 = vmatprep.subr.mxu0 0.0
  %403 = vmatpush1.msra.mxu0 0.0
  %404 = vmatprep.subr.mxu0 0.0
  %405 = vmatpush1.msra.mxu0 0.0
  %406 = vmatprep.subr.mxu0 0.0
  %407 = vmatpush1.msra.mxu0 0.0
  %408 = vmatprep.subr.mxu0 0.0
  %409 = vmatpush1.msra.mxu0 0.0
  %410 = vmatprep.subr.mxu0 0.0
  %411 = vmatpush1.msra.mxu0 0.0
  %412 = vmatprep.subr.mxu0 0.0
  %413 = vmatpush1.msra.mxu0 0.0
  %414 = vmatprep.mubr.f32.mxu0 0.0
  %415 = vmatmul.mubr.f32.gmra.mrb[0].mxu0 %v339
  %v416 = vpop.f32.mrb[0].mxu0
  %v417 = vadd.f32 %v337, %v416
  %v418 = vpop.f32.mrb[0].mxu0
  %419 = vmatprep.mubr.f32.mxu0 0.0
  %420 = vmatmul.mubr.f32.gmra.mrb[0].mxu0 %v342
  %v421 = vpop.f32.mrb[0].mxu0
  %v422 = vadd.f32 %v337, %v421
  %v423 = vpop.f32.mrb[0].mxu0
  %424 = vmatprep.mubr.f32.mxu0 0.0
  %425 = vmatmul.mubr.f32.gmra.mrb[0].mxu0 %v345
  %v426 = vpop.f32.mrb[0].mxu0
  %v427 = vadd.f32 %v337, %v426
  %v428 = vpop.f32.mrb[0].mxu0
  %429 = vdwg.mxu0
  %430 = vrot.lane.b32.xlu0 %v200, 32
  %v431 = vpop.permute.xlu0 %430
  %432 = vrot.lane.b32.xlu0 %v205, 32
  %v433 = vpop.permute.xlu0 %432
  %434 = vrot.lane.b32.xlu0 %v210, 32
  %v435 = vpop.permute.xlu0 %434
  %442 = vrot.lane.b32.xlu0 %v417, 34
  %v443 = vpop.permute.xlu0 %442
  %444 = vrot.lane.b32.xlu0 %v422, 34
  %v445 = vpop.permute.xlu0 %444
  %446 = vrot.lane.b32.xlu0 %v427, 34
  %v447 = vpop.permute.xlu0 %446
  %vm451 = vcmask 261120
  %v452 = vsel %vm451, %v103, %v431
  %v453 = vsel %vm451, %v108, %v433
  %v454 = vsel %vm451, %v113, %v435
  %vm455 = vcmask 277504
  %v456 = vsel %vm455, %v452, %v443
  %v457 = vsel %vm455, %v453, %v445
  %v458 = vsel %vm455, %v454, %v447
  %vm459 = vcmask 293888
  %460 = vst.msk [vmem:[%s2] sm:$0xff] %vm459, %v456
  %461 = vst.msk [vmem:[%s2 + $0x8] sm:$0xff] %vm459, %v457
  %vm462 = vcmask 291840
  %463 = vst.msk [vmem:[%s2 + $0x10] sm:$0x3f] %vm462, %v458
  // Predicated region
  $region10: #{forward.1} parent=0 // pred_check
    _
  $region11: #{forward.1} parent=0 // pred_check_branch
    %465 = sbr.rel (0) target = $region13
  $region12: #{forward.1} parent=0 // pred_region
    _
  $region13: #{forward.1} parent=0 // pred_fallthru
    _
  // Predicated region
  $region14: #{forward.1} parent=0 // pred_check
    _
  $region15: #{forward.1} parent=0 // pred_check_branch
    %467 = sbr.rel (0) target = $region17
  $region16: #{forward.1} parent=0 // pred_region
    _
  $region17: #{forward.1} parent=0 // pred_fallthru
    _

</llo_original>
